<compile_context>
chip_gen: v6e
topology: v6e:2x2x1
jax: 0.10.0
libtpu: 0.0.40
codegen_flags: <defaults>
</compile_context>

<pallas_src>
import numpy as np
import jax
import jax.numpy as jnp
from jax.experimental import pallas as pl
from jax.experimental.pallas import tpu as pltpu


def _round_up(x, m):
    return ((x + m - 1) // m) * m


def _pp_agg_kernel(e_ref, self_ref, mask_ref,
                   w1bd_ref, w2bd_ref, b1t_ref, b2t_ref,
                   w1bt_ref, w3bd_ref, rep_ref, sseg_ref,
                   out_ref):
    f32 = jnp.float32
    cd = w1bd_ref.dtype                 # MXU operand dtype (bf16 default / f32 debug)

    e = e_ref[...]                      # (TB, Nmax*D) neighbor embeddings, lane-major
    sf = self_ref[...]                  # (TB, D)      u_rep / self features (f32)
    mk = mask_ref[...]                  # (TB, Nmax)   1.0 = valid neighbor, 0.0 = pad

    # Attention MLP.  cat(e_u, u_rep) @ W1 == e_u @ W1a + u_rep @ W1b, evaluated
    # for all TB*Nmax (node, neighbor) pairs with one MXU matmul per layer.
    # Weights/embeddings already arrive in the MXU dtype; accumulation stays f32.
    h1 = jnp.dot(e, w1bd_ref[...], preferred_element_type=f32)
    h1 = h1 + jnp.dot(sf.astype(cd), w1bt_ref[...], preferred_element_type=f32)
    h1 = jnp.maximum(h1 + b1t_ref[...], 0.0)
    # TODO(synk): F.dropout is a no-op in eval mode; intentionally not implemented.
    h2 = jnp.dot(h1.astype(cd), w2bd_ref[...], preferred_element_type=f32)
    h2 = jnp.maximum(h2 + b2t_ref[...], 0.0)
    # b3 omitted: a per-row constant bias cancels in the softmax.
    scores = jnp.dot(h2.astype(cd), w3bd_ref[...], preferred_element_type=f32)  # (TB, Nmax)

    # Masked per-node softmax over the neighbor (lane) axis.
    scores = jnp.where(mk > 0.0, scores, jnp.float32(-1e30))
    m = jnp.max(scores, axis=-1, keepdims=True)                  # (TB, 1)
    ex = jnp.exp(scores - m) * mk                                # (TB, Nmax)
    denom = jnp.sum(ex, axis=-1, keepdims=True)                  # (TB, 1)
    d = jnp.maximum(denom, jnp.float32(1e-30))
    inv = pl.reciprocal(d, approx=True)       # EUP slot, essentially free
    inv = inv * (2.0 - d * inv)               # one Newton step -> ~f32 accuracy
    att = ex * inv                                               # (TB, Nmax)

    # Weighted aggregation: agg[t] = sum_n att[t, n] * e_u[t, n, :]
    # (exact 0/1 matmuls keep everything 2D and lane-aligned; f32 accumulation).
    att_lanes = jnp.dot(att, rep_ref[...], preferred_element_type=f32)       # (TB, ND)
    agg = jnp.dot(att_lanes * e.astype(f32), sseg_ref[...],
                  preferred_element_type=f32)                                # (TB, D)

    n_neigh = jnp.sum(mk, axis=-1, keepdims=True)                # (TB, 1)
    out_ref[...] = jnp.where(n_neigh > 0.0, 0.5 * (agg + sf), sf)


def _const_spec(shape):
    """BlockSpec for a grid-invariant operand: constant index map, single-buffered."""
    ndim = len(shape)
    index_map = lambda i: (0,) * ndim
    try:
        # Grid-invariant: no need for double buffering -> halve its VMEM footprint.
        return pl.BlockSpec(shape, index_map, pipeline_mode=pl.Buffered(1))
    except (TypeError, AttributeError):
        # Older jax without pipeline_mode support: fall back to the default.
        return pl.BlockSpec(shape, index_map)


def pp_aggregator(u2e, nodes, neigh_ids, neigh_mask, params, *,
                  block_nodes=256, mxu_dtype=jnp.bfloat16):
    """u2e: (U, D) embedding table; nodes: (B,) int32;
    neigh_ids / neigh_mask: (B, Nmax) padded neighbor ids / validity mask.
    params: (w1a, w1b, b1, w2, b2, w3, b3) with pre-transposed Linear weights
    (y = x @ W + b); W1 of the original Attention is split into W1a (acting on
    e_u) and W1b (acting on u_rep), so cat(e, u) @ W1 == e @ W1a + u @ W1b.
    mxu_dtype: MXU operand dtype (bf16 default, f32 accumulation everywhere;
    pass jnp.float32 for strict parity with the PyTorch reference)."""
    B = int(nodes.shape[0])
    Nmax = int(neigh_ids.shape[1])
    D = int(u2e.shape[1])
    ND = Nmax * D
    cd = jnp.dtype(mxu_dtype)
    w1a, w1b, b1, w2, b2, w3, b3 = params
    del b3  # softmax shift invariance: a per-row constant bias has no effect

    # Scaling guard: the block-diagonal weights grow as (Nmax*D)^2 and would blow
    # VMEM (64 MiB physical on v7x) for large Nmax*D.
    # TODO(synk): rows-major (TB*Nmax, D) @ (D, D) MLP fallback for large Nmax*D.
    wbd_bytes = 2 * ND * ND * cd.itemsize
    if wbd_bytes > 40 * (1 << 20):
        raise ValueError(
            f"block-diagonal attention weights need {wbd_bytes / 2**20:.1f} MiB; "
            "Nmax*D too large for this formulation")

    # ---- plain-JAX glue: embedding gathers + lane-major layout + padding ----
    # TODO(synk): the neighbor gather could be fused into the kernel via
    # scalar-prefetched ids + manual DMA gather from an HBM-resident u2e; kept
    # wrapper-side here for robustness.
    self_feats = jnp.take(u2e, nodes, axis=0).astype(jnp.float32)             # (B, D)
    e_lanes = jnp.take(u2e, neigh_ids.reshape(-1), axis=0)
    e_lanes = e_lanes.reshape(B, ND).astype(cd)                               # (B, Nmax*D)
    mask = neigh_mask.astype(jnp.float32)                                     # (B, Nmax)

    # Node tile: big enough to amortize the ~0.35us per-step overhead, but keep
    # >= 2 grid steps when the batch allows it so both v7x TensorCores get work.
    TB = _round_up(max(min(block_nodes, B), 1), 8)
    B_pad = _round_up(B, TB)
    if B > 8 and B_pad // TB < 2:
        TB = _round_up((B + 1) // 2, 8)
        B_pad = _round_up(B, TB)
    if B_pad != B:
        pz = B_pad - B
        e_lanes = jnp.pad(e_lanes, ((0, pz), (0, 0)))
        self_feats = jnp.pad(self_feats, ((0, pz), (0, 0)))
        mask = jnp.pad(mask, ((0, pz), (0, 0)))

    # ---- grid-invariant constants (constant index maps, single-buffered) ----
    # Built wrapper-side directly in the MXU dtype so the kernel never re-casts.
    eye_n = jnp.eye(Nmax, dtype=jnp.float32)
    w1bd = jnp.kron(eye_n, w1a).astype(cd)                                    # (ND, ND)
    w2bd = jnp.kron(eye_n, w2).astype(cd)                                     # (ND, ND)
    w1bt = jnp.kron(jnp.ones((1, Nmax), jnp.float32), w1b).astype(cd)         # (D, ND)
    w3bd = jnp.kron(eye_n, w3).astype(cd)                                     # (ND, Nmax)
    b1t = jnp.tile(b1, (1, Nmax)).astype(jnp.float32)                         # (1, ND)
    b2t = jnp.tile(b2, (1, Nmax)).astype(jnp.float32)                         # (1, ND)
    rep = jnp.kron(eye_n, jnp.ones((1, D), jnp.float32))                      # (Nmax, ND)
    sseg = jnp.kron(jnp.ones((Nmax, 1), jnp.float32),
                    jnp.eye(D, dtype=jnp.float32))                            # (ND, D)

    # ---- explicit VMEM budget (scoped defaults are only 16/32 MiB) ----
    lane = lambda n: _round_up(n, 128)
    sub = lambda n: _round_up(n, 8)
    wsz, f32b = cd.itemsize, 4
    vmem = 0
    vmem += 2 * TB * lane(ND) * wsz                       # e block (double-buffered)
    vmem += 2 * TB * (lane(D) + lane(Nmax)) * f32b        # self feats + mask
    vmem += 2 * TB * lane(D) * f32b                       # output block
    vmem += 2 * (2 * sub(ND) * lane(ND) * wsz             # w1bd + w2bd
                 + 2 * sub(1) * lane(ND) * f32b           # b1t + b2t
                 + sub(D) * lane(ND) * wsz                # w1bt
                 + sub(ND) * lane(Nmax) * wsz             # w3bd
                 + sub(Nmax) * lane(ND) * f32b            # rep
                 + sub(ND) * lane(D) * f32b)              # sseg
    vmem += 5 * TB * lane(ND) * f32b                      # h1/h2/casts/att_lanes temps
    vmem_limit = int(min(max(vmem * 3 // 2 + (8 << 20), 32 << 20), 64 << 20))

    out = pl.pallas_call(
        _pp_agg_kernel,
        out_shape=jax.ShapeDtypeStruct((B_pad, D), jnp.float32),
        grid_spec=pltpu.PrefetchScalarGridSpec(
            num_scalar_prefetch=0,
            grid=(B_pad // TB,),
            in_specs=[
                pl.BlockSpec((TB, ND), lambda i: (i, 0)),     # neighbor embeddings
                pl.BlockSpec((TB, D), lambda i: (i, 0)),      # self feats / u_rep
                pl.BlockSpec((TB, Nmax), lambda i: (i, 0)),   # neighbor mask
                _const_spec((ND, ND)),                        # block-diag W1a
                _const_spec((ND, ND)),                        # block-diag W2
                _const_spec((1, ND)),                         # tiled b1
                _const_spec((1, ND)),                         # tiled b2
                _const_spec((D, ND)),                         # tiled W1b
                _const_spec((ND, Nmax)),                      # block-diag w3
                _const_spec((Nmax, ND)),                      # replication matrix
                _const_spec((ND, D)),                         # segment-sum matrix
            ],
            out_specs=pl.BlockSpec((TB, D), lambda i: (i, 0)),
        ),
        compiler_params=pltpu.CompilerParams(
            dimension_semantics=("parallel",),
            vmem_limit_bytes=vmem_limit),
    )(e_lanes, self_feats, mask, w1bd, w2bd, b1t, b2t, w1bt, w3bd, rep, sseg)
    return out[:B]


def _reference(u2e, nodes, neigh_ids, counts, params):
    """Plain NumPy reference mirroring the PyTorch forward (eval mode)."""
    u2e = np.asarray(u2e)
    w1a, w1b, b1, w2, b2, w3, b3 = [np.asarray(p) for p in params]
    neigh_ids = np.asarray(neigh_ids)
    B, D = len(nodes), u2e.shape[1]
    ref = np.zeros((B, D), np.float32)
    for i in range(B):
        sf = u2e[int(nodes[i])]
        c = int(counts[i])
        if c == 0:
            ref[i] = sf
        else:
            eu = u2e[neigh_ids[i, :c]]
            x1 = np.maximum(eu @ w1a + sf @ w1b + b1, 0.0)
            x2 = np.maximum(x1 @ w2 + b2, 0.0)
            s = x2 @ w3 + b3
            s = s - s.max()
            a = np.exp(s)
            a = a / a.sum()
            ref[i] = 0.5 * ((eu * a).sum(axis=0) + sf)
    return ref


def _make_neighbors(rng, B, Nmax, num_users, counts):
    ids = np.zeros((B, Nmax), np.int32)
    msk = np.zeros((B, Nmax), np.float32)
    for i, c in enumerate(counts):
        if c > 0:
            ids[i, :c] = rng.randint(0, num_users, size=c)
            msk[i, :c] = 1.0
    return jnp.asarray(ids), jnp.asarray(msk)


if __name__ == "__main__":
    D = 32
    key = jax.random.PRNGKey(0)
    ks = jax.random.split(key, 9)
    scale = 0.1
    w1a = scale * jax.random.normal(ks[1], (D, D), jnp.float32)
    w1b = scale * jax.random.normal(ks[2], (D, D), jnp.float32)
    b1 = scale * jax.random.normal(ks[3], (1, D), jnp.float32)
    w2 = scale * jax.random.normal(ks[4], (D, D), jnp.float32)
    b2 = scale * jax.random.normal(ks[5], (1, D), jnp.float32)
    w3 = scale * jax.random.normal(ks[6], (D, 1), jnp.float32)
    b3 = scale * jax.random.normal(ks[7], (1, 1), jnp.float32)
    params = (w1a, w1b, b1, w2, b2, w3, b3)

    # --- test 1: tiny batch, includes an empty neighbor list ---
    num_users, B, Nmax = 12, 4, 8
    u2e = jax.random.normal(ks[0], (num_users, D), jnp.float32)
    nodes = jnp.array([0, 3, 7, 11], jnp.int32)
    counts = [5, 8, 0, 3]
    rng = np.random.RandomState(0)
    neigh_ids, neigh_mask = _make_neighbors(rng, B, Nmax, num_users, counts)
    ref = _reference(u2e, np.asarray(nodes), neigh_ids, counts, params)

    # strict-parity f32 validation mode
    out_f32 = jax.block_until_ready(
        pp_aggregator(u2e, nodes, neigh_ids, neigh_mask, params,
                      mxu_dtype=jnp.float32))
    assert np.allclose(np.asarray(out_f32), ref, atol=1e-4, rtol=1e-4), \
        f"mismatch (test1 f32): max abs err {np.abs(np.asarray(out_f32) - ref).max()}"

    # default fast bf16-MXU mode (f32 accumulation; loosened tolerance)
    out_bf = jax.block_until_ready(
        pp_aggregator(u2e, nodes, neigh_ids, neigh_mask, params))
    assert np.allclose(np.asarray(out_bf), ref, atol=3e-2, rtol=3e-2), \
        f"mismatch (test1 bf16): max abs err {np.abs(np.asarray(out_bf) - ref).max()}"

    # --- test 2: larger batch (multi-step grid, batch padding, Nmax not 8) ---
    num_users2, B2, Nmax2 = 50, 200, 20
    u2e2 = jax.random.normal(ks[8], (num_users2, D), jnp.float32)
    rng2 = np.random.RandomState(1)
    nodes2 = jnp.asarray(rng2.randint(0, num_users2, size=B2).astype(np.int32))
    counts2 = rng2.randint(0, Nmax2 + 1, size=B2)
    counts2[::37] = 0  # force some empty neighbor lists
    neigh_ids2, neigh_mask2 = _make_neighbors(rng2, B2, Nmax2, num_users2, counts2)
    ref2 = _reference(u2e2, np.asarray(nodes2), neigh_ids2, counts2, params)

    out2_f32 = jax.block_until_ready(
        pp_aggregator(u2e2, nodes2, neigh_ids2, neigh_mask2, params,
                      mxu_dtype=jnp.float32))
    assert np.allclose(np.asarray(out2_f32), ref2, atol=1e-4, rtol=1e-4), \
        f"mismatch (test2 f32): max abs err {np.abs(np.asarray(out2_f32) - ref2).max()}"

    out2_bf = jax.block_until_ready(
        pp_aggregator(u2e2, nodes2, neigh_ids2, neigh_mask2, params))
    assert np.allclose(np.asarray(out2_bf), ref2, atol=3e-2, rtol=3e-2), \
        f"mismatch (test2 bf16): max abs err {np.abs(np.asarray(out2_bf) - ref2).max()}"

    print("KERNEL_OK")
</pallas_src>

<mosaic_0001>
module attributes {stable_mosaic.version = 11 : i64} {
  func.func @_pp_agg_kernel(%arg0: i32, %arg1: memref<8x256xf32, #tpu.memory_space<vmem>>, %arg2: memref<8x32xf32, #tpu.memory_space<vmem>>, %arg3: memref<8x8xf32, #tpu.memory_space<vmem>>, %arg4: memref<256x256xf32, #tpu.memory_space<vmem>>, %arg5: memref<256x256xf32, #tpu.memory_space<vmem>>, %arg6: memref<1x256xf32, #tpu.memory_space<vmem>>, %arg7: memref<1x256xf32, #tpu.memory_space<vmem>>, %arg8: memref<32x256xf32, #tpu.memory_space<vmem>>, %arg9: memref<256x8xf32, #tpu.memory_space<vmem>>, %arg10: memref<8x256xf32, #tpu.memory_space<vmem>>, %arg11: memref<256x32xf32, #tpu.memory_space<vmem>>, %arg12: memref<8x32xf32, #tpu.memory_space<vmem>>) attributes {dimension_semantics = [#tpu.dimension_semantics<parallel>], iteration_bounds = array<i64: 1>, scalar_prefetch = 0 : i64, scratch_operands = 0 : i64, tpu.core_type = #tpu.core_type<tc>, window_params = [{transform_indices = @transform_0, window_bounds = array<i64: 8, 256>}, {transform_indices = @transform_1, window_bounds = array<i64: 8, 32>}, {transform_indices = @transform_2, window_bounds = array<i64: 8, 8>}, {pipeline_mode = #tpu.pipeline_mode<synchronous>, transform_indices = @transform_3, window_bounds = array<i64: 256, 256>}, {pipeline_mode = #tpu.pipeline_mode<synchronous>, transform_indices = @transform_4, window_bounds = array<i64: 256, 256>}, {pipeline_mode = #tpu.pipeline_mode<synchronous>, transform_indices = @transform_5, window_bounds = array<i64: 1, 256>}, {pipeline_mode = #tpu.pipeline_mode<synchronous>, transform_indices = @transform_6, window_bounds = array<i64: 1, 256>}, {pipeline_mode = #tpu.pipeline_mode<synchronous>, transform_indices = @transform_7, window_bounds = array<i64: 32, 256>}, {pipeline_mode = #tpu.pipeline_mode<synchronous>, transform_indices = @transform_8, window_bounds = array<i64: 256, 8>}, {pipeline_mode = #tpu.pipeline_mode<synchronous>, transform_indices = @transform_9, window_bounds = array<i64: 8, 256>}, {pipeline_mode = #tpu.pipeline_mode<synchronous>, transform_indices = @transform_10, window_bounds = array<i64: 256, 32>}, {transform_indices = @transform_11, window_bounds = array<i64: 8, 32>}]} {
    %c0 = arith.constant 0 : index
    %c0_0 = arith.constant 0 : index
    %0 = vector.load %arg1[%c0, %c0_0] : memref<8x256xf32, #tpu.memory_space<vmem>>, vector<8x256xf32>
    %c0_1 = arith.constant 0 : index
    %c0_2 = arith.constant 0 : index
    %1 = vector.load %arg2[%c0_1, %c0_2] : memref<8x32xf32, #tpu.memory_space<vmem>>, vector<8x32xf32>
    %c0_3 = arith.constant 0 : index
    %c0_4 = arith.constant 0 : index
    %2 = vector.load %arg3[%c0_3, %c0_4] : memref<8x8xf32, #tpu.memory_space<vmem>>, vector<8x8xf32>
    %c0_5 = arith.constant 0 : index
    %c0_6 = arith.constant 0 : index
    %3 = vector.load %arg4[%c0_5, %c0_6] : memref<256x256xf32, #tpu.memory_space<vmem>>, vector<256x256xf32>
    %cst = arith.constant dense<0.000000e+00> : vector<8x256xf32>
    %4 = tpu.matmul %0, %3, %cst {dimension_numbers = #tpu.dot_dimension_numbers<[1], [0], [0], [1], [0, 0, 1, 1], [], []>} : vector<8x256xf32>, vector<256x256xf32>, vector<8x256xf32> -> vector<8x256xf32>
    %c0_7 = arith.constant 0 : index
    %c0_8 = arith.constant 0 : index
    %5 = vector.load %arg8[%c0_7, %c0_8] : memref<32x256xf32, #tpu.memory_space<vmem>>, vector<32x256xf32>
    %cst_9 = arith.constant dense<0.000000e+00> : vector<8x256xf32>
    %6 = tpu.matmul %1, %5, %cst_9 {dimension_numbers = #tpu.dot_dimension_numbers<[1], [0], [0], [1], [0, 0, 1, 1], [], []>} : vector<8x32xf32>, vector<32x256xf32>, vector<8x256xf32> -> vector<8x256xf32>
    %7 = arith.addf %4, %6 : vector<8x256xf32>
    %c0_10 = arith.constant 0 : index
    %c0_11 = arith.constant 0 : index
    %8 = vector.load %arg6[%c0_10, %c0_11] : memref<1x256xf32, #tpu.memory_space<vmem>>, vector<1x256xf32>
    %9 = vector.broadcast %8 : vector<1x256xf32> to vector<8x256xf32>
    %10 = arith.addf %7, %9 : vector<8x256xf32>
    %cst_12 = arith.constant 0.000000e+00 : f32
    %11 = vector.broadcast %cst_12 : f32 to vector<8x256xf32>
    %12 = arith.maximumf %10, %11 : vector<8x256xf32>
    %c0_13 = arith.constant 0 : index
    %c0_14 = arith.constant 0 : index
    %13 = vector.load %arg5[%c0_13, %c0_14] : memref<256x256xf32, #tpu.memory_space<vmem>>, vector<256x256xf32>
    %cst_15 = arith.constant dense<0.000000e+00> : vector<8x256xf32>
    %14 = tpu.matmul %12, %13, %cst_15 {dimension_numbers = #tpu.dot_dimension_numbers<[1], [0], [0], [1], [0, 0, 1, 1], [], []>} : vector<8x256xf32>, vector<256x256xf32>, vector<8x256xf32> -> vector<8x256xf32>
    %c0_16 = arith.constant 0 : index
    %c0_17 = arith.constant 0 : index
    %15 = vector.load %arg7[%c0_16, %c0_17] : memref<1x256xf32, #tpu.memory_space<vmem>>, vector<1x256xf32>
    %16 = vector.broadcast %15 : vector<1x256xf32> to vector<8x256xf32>
    %17 = arith.addf %14, %16 : vector<8x256xf32>
    %cst_18 = arith.constant 0.000000e+00 : f32
    %18 = vector.broadcast %cst_18 : f32 to vector<8x256xf32>
    %19 = arith.maximumf %17, %18 : vector<8x256xf32>
    %c0_19 = arith.constant 0 : index
    %c0_20 = arith.constant 0 : index
    %20 = vector.load %arg9[%c0_19, %c0_20] : memref<256x8xf32, #tpu.memory_space<vmem>>, vector<256x8xf32>
    %cst_21 = arith.constant dense<0.000000e+00> : vector<8x8xf32>
    %21 = tpu.matmul %19, %20, %cst_21 {dimension_numbers = #tpu.dot_dimension_numbers<[1], [0], [0], [1], [0, 0, 1, 1], [], []>} : vector<8x256xf32>, vector<256x8xf32>, vector<8x8xf32> -> vector<8x8xf32>
    %cst_22 = arith.constant 0.000000e+00 : f32
    %22 = vector.broadcast %cst_22 : f32 to vector<8x8xf32>
    %23 = arith.cmpf ogt, %2, %22 : vector<8x8xf32>
    %cst_23 = arith.constant -1.000000e+30 : f32
    %24 = vector.broadcast %cst_23 : f32 to vector<8x8xf32>
    %25 = arith.select %23, %21, %24 : vector<8x8xi1>, vector<8x8xf32>
    %cst_24 = arith.constant dense<0xFF800000> : vector<8xf32>
    %26 = vector.multi_reduction <maximumf>, %25, %cst_24 [1] : vector<8x8xf32> to vector<8xf32>
    %27 = vector.shape_cast %26 : vector<8xf32> to vector<8x1xf32>
    %28 = vector.broadcast %27 : vector<8x1xf32> to vector<8x8xf32>
    %29 = arith.subf %25, %28 : vector<8x8xf32>
    %30 = math.exp %29 : vector<8x8xf32>
    %31 = arith.mulf %30, %2 : vector<8x8xf32>
    %cst_25 = arith.constant dense<0.000000e+00> : vector<8xf32>
    %32 = vector.multi_reduction <add>, %31, %cst_25 [1] : vector<8x8xf32> to vector<8xf32>
    %33 = vector.shape_cast %32 : vector<8xf32> to vector<8x1xf32>
    %cst_26 = arith.constant 1.000000e-30 : f32
    %34 = vector.broadcast %cst_26 : f32 to vector<8x1xf32>
    %35 = arith.maximumf %33, %34 : vector<8x1xf32>
    %36 = tpu.reciprocal %35 {approx = true} : vector<8x1xf32> -> vector<8x1xf32>
    %37 = arith.mulf %35, %36 : vector<8x1xf32>
    %cst_27 = arith.constant 2.000000e+00 : f32
    %38 = vector.broadcast %cst_27 : f32 to vector<8x1xf32>
    %39 = arith.subf %38, %37 : vector<8x1xf32>
    %40 = arith.mulf %36, %39 : vector<8x1xf32>
    %41 = vector.broadcast %40 : vector<8x1xf32> to vector<8x8xf32>
    %42 = arith.mulf %31, %41 : vector<8x8xf32>
    %c0_28 = arith.constant 0 : index
    %c0_29 = arith.constant 0 : index
    %43 = vector.load %arg10[%c0_28, %c0_29] : memref<8x256xf32, #tpu.memory_space<vmem>>, vector<8x256xf32>
    %cst_30 = arith.constant dense<0.000000e+00> : vector<8x256xf32>
    %44 = tpu.matmul %42, %43, %cst_30 {dimension_numbers = #tpu.dot_dimension_numbers<[1], [0], [0], [1], [0, 0, 1, 1], [], []>} : vector<8x8xf32>, vector<8x256xf32>, vector<8x256xf32> -> vector<8x256xf32>
    %45 = arith.mulf %44, %0 : vector<8x256xf32>
    %c0_31 = arith.constant 0 : index
    %c0_32 = arith.constant 0 : index
    %46 = vector.load %arg11[%c0_31, %c0_32] : memref<256x32xf32, #tpu.memory_space<vmem>>, vector<256x32xf32>
    %cst_33 = arith.constant dense<0.000000e+00> : vector<8x32xf32>
    %47 = tpu.matmul %45, %46, %cst_33 {dimension_numbers = #tpu.dot_dimension_numbers<[1], [0], [0], [1], [0, 0, 1, 1], [], []>} : vector<8x256xf32>, vector<256x32xf32>, vector<8x32xf32> -> vector<8x32xf32>
    %cst_34 = arith.constant dense<0.000000e+00> : vector<8xf32>
    %48 = vector.multi_reduction <add>, %2, %cst_34 [1] : vector<8x8xf32> to vector<8xf32>
    %49 = vector.shape_cast %48 : vector<8xf32> to vector<8x1xf32>
    %cst_35 = arith.constant 0.000000e+00 : f32
    %50 = vector.broadcast %cst_35 : f32 to vector<8x1xf32>
    %51 = arith.cmpf ogt, %49, %50 : vector<8x1xf32>
    %52 = arith.addf %47, %1 : vector<8x32xf32>
    %cst_36 = arith.constant 5.000000e-01 : f32
    %53 = vector.broadcast %cst_36 : f32 to vector<8x32xf32>
    %54 = arith.mulf %53, %52 : vector<8x32xf32>
    %55 = vector.shape_cast %51 : vector<8x1xi1> to vector<8x1xi1>
    %56 = vector.broadcast %55 : vector<8x1xi1> to vector<8x32xi1>
    %57 = arith.select %56, %54, %1 : vector<8x32xi1>, vector<8x32xf32>
    %c0_37 = arith.constant 0 : index
    %c0_38 = arith.constant 0 : index
    %58 = vector.load %arg12[%c0_37, %c0_38] : memref<8x32xf32, #tpu.memory_space<vmem>>, vector<8x32xf32>
    tpu.vector_store %arg12[%c0_37, %c0_38], %57 {strides = array<i32>} : memref<8x32xf32, #tpu.memory_space<vmem>>, vector<8x32xf32>,
    return
  }
  func.func @transform_0(%arg0: i32) -> (i32, i32) {
    %c0_i32 = arith.constant 0 : i32
    %c0_i32_0 = arith.constant 0 : i32
    return %arg0, %c0_i32 : i32, i32
  }
  func.func @transform_1(%arg0: i32) -> (i32, i32) {
    %c0_i32 = arith.constant 0 : i32
    %c0_i32_0 = arith.constant 0 : i32
    return %arg0, %c0_i32 : i32, i32
  }
  func.func @transform_2(%arg0: i32) -> (i32, i32) {
    %c0_i32 = arith.constant 0 : i32
    %c0_i32_0 = arith.constant 0 : i32
    return %arg0, %c0_i32 : i32, i32
  }
  func.func @transform_3(%arg0: i32) -> (i32, i32) {
    %c0_i32 = arith.constant 0 : i32
    %c0_i32_0 = arith.constant 0 : i32
    %c0_i32_1 = arith.constant 0 : i32
    return %c0_i32, %c0_i32_0 : i32, i32
  }
  func.func @transform_4(%arg0: i32) -> (i32, i32) {
    %c0_i32 = arith.constant 0 : i32
    %c0_i32_0 = arith.constant 0 : i32
    %c0_i32_1 = arith.constant 0 : i32
    return %c0_i32, %c0_i32_0 : i32, i32
  }
  func.func @transform_5(%arg0: i32) -> (i32, i32) {
    %c0_i32 = arith.constant 0 : i32
    %c0_i32_0 = arith.constant 0 : i32
    %c0_i32_1 = arith.constant 0 : i32
    return %c0_i32, %c0_i32_0 : i32, i32
  }
  func.func @transform_6(%arg0: i32) -> (i32, i32) {
    %c0_i32 = arith.constant 0 : i32
    %c0_i32_0 = arith.constant 0 : i32
    %c0_i32_1 = arith.constant 0 : i32
    return %c0_i32, %c0_i32_0 : i32, i32
  }
  func.func @transform_7(%arg0: i32) -> (i32, i32) {
    %c0_i32 = arith.constant 0 : i32
    %c0_i32_0 = arith.constant 0 : i32
    %c0_i32_1 = arith.constant 0 : i32
    return %c0_i32, %c0_i32_0 : i32, i32
  }
  func.func @transform_8(%arg0: i32) -> (i32, i32) {
    %c0_i32 = arith.constant 0 : i32
    %c0_i32_0 = arith.constant 0 : i32
    %c0_i32_1 = arith.constant 0 : i32
    return %c0_i32, %c0_i32_0 : i32, i32
  }
  func.func @transform_9(%arg0: i32) -> (i32, i32) {
    %c0_i32 = arith.constant 0 : i32
    %c0_i32_0 = arith.constant 0 : i32
    %c0_i32_1 = arith.constant 0 : i32
    return %c0_i32, %c0_i32_0 : i32, i32
  }
  func.func @transform_10(%arg0: i32) -> (i32, i32) {
    %c0_i32 = arith.constant 0 : i32
    %c0_i32_0 = arith.constant 0 : i32
    %c0_i32_1 = arith.constant 0 : i32
    return %c0_i32, %c0_i32_0 : i32, i32
  }
  func.func @transform_11(%arg0: i32) -> (i32, i32) {
    %c0_i32 = arith.constant 0 : i32
    %c0_i32_0 = arith.constant 0 : i32
    return %arg0, %c0_i32 : i32, i32
  }
}

</mosaic_0001>

<llo_original>
// kernel: tpu_custom_call.1
$region0: #{tpu_custom_call.1}
  #allocation0 [shape = 'u32[]', space=smem, size = 0x4, offset = 0x4, fixed_abs, tag = 'smem constant byte address 0x4 - core index']
  #allocation1 [shape = 'u32[144,128]{1,0:T(1,128)}', space=vmem, size = 0x12000, scoped, tag = 'internal scratch']
  %s0 = inlined_call_operand.vmem [shape: f32[8,256], index: 0, kind: input, shape index: {}]
  %s1 = inlined_call_operand.hbm [shape: f32[8,32], index: 1, kind: input, shape index: {}]
  %s2 = inlined_call_operand.hbm [shape: f32[8,8], index: 2, kind: input, shape index: {}]
  %s3 = inlined_call_operand.vmem [shape: f32[256,256], index: 3, kind: input, shape index: {}]
  %s4 = inlined_call_operand.hbm [shape: f32[256,256], index: 4, kind: input, shape index: {}]
  %s5 = inlined_call_operand.vmem [shape: f32[1,256], index: 5, kind: input, shape index: {}]
  %s6 = inlined_call_operand.vmem [shape: f32[1,256], index: 6, kind: input, shape index: {}]
  %s7 = inlined_call_operand.hbm [shape: f32[32,256], index: 7, kind: input, shape index: {}]
  %s8 = inlined_call_operand.vmem [shape: f32[256,8], index: 8, kind: input, shape index: {}]
  %s9 = inlined_call_operand.hbm [shape: f32[8,256], index: 9, kind: input, shape index: {}]
  %s10 = inlined_call_operand.vmem [shape: f32[256,32], index: 10, kind: input, shape index: {}]
  %s11 = inlined_call_operand.hbm [shape: f32[8,32], index: 11, kind: output, shape index: {}]
  %s12 = sld [smem:[#allocation0]]
  $region74: #{tpu_custom_call.1} parent=0
    _
  %s14 = ssub.s32 1, %s12
  %s15 = scalar_select 0, %s14, %s12
  $region1: #{tpu_custom_call.1} parent=0
    #allocation2 [shape = 'u8[4096]{0}', space=vmem, size = 0x1000, scoped, tag = 'input window, operand 1, single buffered']
    #allocation3 [shape = 's32[1]{0}', space=sflag, size = 0x4, scoped, tag = 'scoped memory for tpu_custom_call.1']
    #allocation4 [shape = 's32[1]{0}', space=sflag, size = 0x4, scoped, tag = 'scoped memory for tpu_custom_call.1']
    #allocation5 [shape = 'u8[4096]{0}', space=vmem, size = 0x1000, scoped, tag = 'input window, operand 2, single buffered']
    #allocation6 [shape = 's32[1]{0}', space=sflag, size = 0x4, scoped, tag = 'scoped memory for tpu_custom_call.1']
    #allocation7 [shape = 'u8[262144]{0}', space=vmem, size = 0x40000, scoped, tag = 'input window, operand 4, single buffered']
    #allocation8 [shape = 'u8[32768]{0}', space=vmem, size = 0x8000, scoped, tag = 'input window, operand 7, single buffered']
    #allocation9 [shape = 's32[1]{0}', space=sflag, size = 0x4, scoped, tag = 'scoped memory for tpu_custom_call.1']
    #allocation10 [shape = 'u8[8192]{0}', space=vmem, size = 0x2000, scoped, tag = 'input window, operand 9, single buffered']
    #allocation11 [shape = 'u8[4096]{0}', space=vmem, size = 0x1000, scoped, tag = 'output window, operand 0, single buffered']
    %16 = vsyncpa [#allocation3], 0
    %17 = vsyncpa [#allocation6], 0
    %18 = vsyncpa [#allocation9], 0
    %19 = vsyncpa [#allocation4], 0
    // Predicated region
    $region2: #{tpu_custom_call.1} parent=1 // pred_check
      _
    $region3: #{tpu_custom_call.1} parent=1 // pred_check_branch
      %21 = sbr.rel (0) target = $region5
    $region4: #{tpu_custom_call.1} parent=1 // pred_region
      _
    $region5: #{tpu_custom_call.1} parent=1 // pred_fallthru
      _
    // Predicated region
    $region6: #{tpu_custom_call.1} parent=1 // pred_check
      _
    $region7: #{tpu_custom_call.1} parent=1 // pred_check_branch
      %23 = sbr.rel (0) target = $region9
    $region8: #{tpu_custom_call.1} parent=1 // pred_region
      %s25 = ssub.s32 128, 128
      %26 = vsyncadd [#allocation3], %s25
      %s28 = sshll.u32 [#allocation2], 4
      %s29 = int_to_ptr.vmem [resolvable:$true] %s28
      %31 = dma.hbm_to_vmem [thread:$0]  %s1, 128, %s29, [#allocation3]
    $region9: #{tpu_custom_call.1} parent=1 // pred_fallthru
      _
    // Predicated region
    $region10: #{tpu_custom_call.1} parent=1 // pred_check
      _
    $region11: #{tpu_custom_call.1} parent=1 // pred_check_branch
      %33 = sbr.rel (0) target = $region13
    $region12: #{tpu_custom_call.1} parent=1 // pred_region
      %s35 = ssub.s32 128, 128
      %36 = vsyncadd [#allocation6], %s35
      %s38 = sshll.u32 [#allocation5], 4
      %s39 = int_to_ptr.vmem [resolvable:$true] %s38
      %41 = dma.hbm_to_vmem [thread:$0]  %s2, 128, %s39, [#allocation6]
    $region13: #{tpu_custom_call.1} parent=1 // pred_fallthru
      _
    // Predicated region
    $region14: #{tpu_custom_call.1} parent=1 // pred_check
      _
    $region15: #{tpu_custom_call.1} parent=1 // pred_check_branch
      %43 = sbr.rel (0) target = $region17
    $region16: #{tpu_custom_call.1} parent=1 // pred_region
      _
    $region17: #{tpu_custom_call.1} parent=1 // pred_fallthru
      _
    // Predicated region
    $region18: #{tpu_custom_call.1} parent=1 // pred_check
      _
    $region19: #{tpu_custom_call.1} parent=1 // pred_check_branch
      %45 = sbr.rel (0) target = $region21
    $region20: #{tpu_custom_call.1} parent=1 // pred_region
      %s47 = ssub.s32 8192, 8192
      %48 = vsyncadd [#allocation6], %s47
      %s49 = sshll.u32 [#allocation7], 4
      %s50 = int_to_ptr.vmem [resolvable:$true] %s49
      %55 = dma.hbm_to_vmem [thread:$0]  %s4, 8192, %s50, [#allocation6], 256, 256, 16
    $region21: #{tpu_custom_call.1} parent=1 // pred_fallthru
      _
    // Predicated region
    $region22: #{tpu_custom_call.1} parent=1 // pred_check
      _
    $region23: #{tpu_custom_call.1} parent=1 // pred_check_branch
      %57 = sbr.rel (0) target = $region25
    $region24: #{tpu_custom_call.1} parent=1 // pred_region
      _
    $region25: #{tpu_custom_call.1} parent=1 // pred_fallthru
      _
    // Predicated region
    $region26: #{tpu_custom_call.1} parent=1 // pred_check
      _
    $region27: #{tpu_custom_call.1} parent=1 // pred_check_branch
      %59 = sbr.rel (0) target = $region29
    $region28: #{tpu_custom_call.1} parent=1 // pred_region
      _
    $region29: #{tpu_custom_call.1} parent=1 // pred_fallthru
      _
    // Predicated region
    $region30: #{tpu_custom_call.1} parent=1 // pred_check
      _
    $region31: #{tpu_custom_call.1} parent=1 // pred_check_branch
      %61 = sbr.rel (0) target = $region33
    $region32: #{tpu_custom_call.1} parent=1 // pred_region
      %s63 = ssub.s32 1024, 1024
      %64 = vsyncadd [#allocation9], %s63
      %s65 = sshll.u32 [#allocation8], 4
      %s66 = int_to_ptr.vmem [resolvable:$true] %s65
      %71 = dma.hbm_to_vmem [thread:$0]  %s7, 1024, %s66, [#allocation9], 256, 256, 16
    $region33: #{tpu_custom_call.1} parent=1 // pred_fallthru
      _
    // Predicated region
    $region34: #{tpu_custom_call.1} parent=1 // pred_check
      _
    $region35: #{tpu_custom_call.1} parent=1 // pred_check_branch
      %73 = sbr.rel (0) target = $region37
    $region36: #{tpu_custom_call.1} parent=1 // pred_region
      _
    $region37: #{tpu_custom_call.1} parent=1 // pred_fallthru
      _
    // Predicated region
    $region38: #{tpu_custom_call.1} parent=1 // pred_check
      _
    $region39: #{tpu_custom_call.1} parent=1 // pred_check_branch
      %75 = sbr.rel (0) target = $region41
    $region40: #{tpu_custom_call.1} parent=1 // pred_region
      %s77 = ssub.s32 256, 256
      %78 = vsyncadd [#allocation9], %s77
      %s80 = sshll.u32 [#allocation10], 4
      %s81 = int_to_ptr.vmem [resolvable:$true] %s80
      %83 = dma.hbm_to_vmem [thread:$0]  %s9, 256, %s81, [#allocation9]
    $region41: #{tpu_custom_call.1} parent=1 // pred_fallthru
      _
    // Predicated region
    $region42: #{tpu_custom_call.1} parent=1 // pred_check
      _
    $region43: #{tpu_custom_call.1} parent=1 // pred_check_branch
      %85 = sbr.rel (0) target = $region45
    $region44: #{tpu_custom_call.1} parent=1 // pred_region
      _
    $region45: #{tpu_custom_call.1} parent=1 // pred_fallthru
      _
    // Predicated region
    $region46: #{tpu_custom_call.1} parent=1 // pred_check
      _
    $region47: #{tpu_custom_call.1} parent=1 // pred_check_branch
      %87 = sbr.rel (0) target = $region49
    $region48: #{tpu_custom_call.1} parent=1 // pred_region
      %88 = dma.done [#allocation3], 128
    $region49: #{tpu_custom_call.1} parent=1 // pred_fallthru
      _
    // Predicated region
    $region50: #{tpu_custom_call.1} parent=1 // pred_check
      _
    $region51: #{tpu_custom_call.1} parent=1 // pred_check_branch
      %90 = sbr.rel (0) target = $region53
    $region52: #{tpu_custom_call.1} parent=1 // pred_region
      %91 = dma.done [#allocation6], 128
    $region53: #{tpu_custom_call.1} parent=1 // pred_fallthru
      _
    // Predicated region
    $region54: #{tpu_custom_call.1} parent=1 // pred_check
      _
    $region55: #{tpu_custom_call.1} parent=1 // pred_check_branch
      %93 = sbr.rel (0) target = $region57
    $region56: #{tpu_custom_call.1} parent=1 // pred_region
      %94 = dma.done [#allocation6], 8192
    $region57: #{tpu_custom_call.1} parent=1 // pred_fallthru
      _
    // Predicated region
    $region58: #{tpu_custom_call.1} parent=1 // pred_check
      _
    $region59: #{tpu_custom_call.1} parent=1 // pred_check_branch
      %96 = sbr.rel (0) target = $region61
    $region60: #{tpu_custom_call.1} parent=1 // pred_region
      %97 = dma.done [#allocation9], 1024
    $region61: #{tpu_custom_call.1} parent=1 // pred_fallthru
      _
    // Predicated region
    $region62: #{tpu_custom_call.1} parent=1 // pred_check
      _
    $region63: #{tpu_custom_call.1} parent=1 // pred_check_branch
      %99 = sbr.rel (0) target = $region65
    $region64: #{tpu_custom_call.1} parent=1 // pred_region
      %100 = dma.done [#allocation9], 256
    $region65: #{tpu_custom_call.1} parent=1 // pred_fallthru
      _
    %v101 = vld [vmem:[%s0] sm:$0xff]
    %v102 = vld [vmem:[%s0 + $0x8] sm:$0xff]
    %v103 = vld [vmem:[#allocation2] sm:$0xff]
    %v104 = vld [vmem:[#allocation5] sm:$0xff]
    %v105 = vld [vmem:[%s3] sm:$0xff]
    %v106 = vld [vmem:[%s3 + $0x8] sm:$0xff]
    %v107 = vld [vmem:[%s3 + $0x10] sm:$0xff]
    %v108 = vld [vmem:[%s3 + $0x18] sm:$0xff]
    %v109 = vld [vmem:[%s3 + $0x20] sm:$0xff]
    %v110 = vld [vmem:[%s3 + $0x28] sm:$0xff]
    %v111 = vld [vmem:[%s3 + $0x30] sm:$0xff]
    %v112 = vld [vmem:[%s3 + $0x38] sm:$0xff]
    %v113 = vld [vmem:[%s3 + $0x40] sm:$0xff]
    %v114 = vld [vmem:[%s3 + $0x48] sm:$0xff]
    %v115 = vld [vmem:[%s3 + $0x50] sm:$0xff]
    %v116 = vld [vmem:[%s3 + $0x58] sm:$0xff]
    %v117 = vld [vmem:[%s3 + $0x60] sm:$0xff]
    %v118 = vld [vmem:[%s3 + $0x68] sm:$0xff]
    %v119 = vld [vmem:[%s3 + $0x70] sm:$0xff]
    %v120 = vld [vmem:[%s3 + $0x78] sm:$0xff]
    %v121 = vld [vmem:[%s3 + $0x80] sm:$0xff]
    %v122 = vld [vmem:[%s3 + $0x88] sm:$0xff]
    %v123 = vld [vmem:[%s3 + $0x90] sm:$0xff]
    %v124 = vld [vmem:[%s3 + $0x98] sm:$0xff]
    %v125 = vld [vmem:[%s3 + $0xa0] sm:$0xff]
    %v126 = vld [vmem:[%s3 + $0xa8] sm:$0xff]
    %v127 = vld [vmem:[%s3 + $0xb0] sm:$0xff]
    %v128 = vld [vmem:[%s3 + $0xb8] sm:$0xff]
    %v129 = vld [vmem:[%s3 + $0xc0] sm:$0xff]
    %v130 = vld [vmem:[%s3 + $0xc8] sm:$0xff]
    %v131 = vld [vmem:[%s3 + $0xd0] sm:$0xff]
    %v132 = vld [vmem:[%s3 + $0xd8] sm:$0xff]
    %v133 = vld [vmem:[%s3 + $0xe0] sm:$0xff]
    %v134 = vld [vmem:[%s3 + $0xe8] sm:$0xff]
    %v135 = vld [vmem:[%s3 + $0xf0] sm:$0xff]
    %v136 = vld [vmem:[%s3 + $0xf8] sm:$0xff]
    %v137 = vld [vmem:[%s3 + $0x100] sm:$0xff]
    %v138 = vld [vmem:[%s3 + $0x108] sm:$0xff]
    %v139 = vld [vmem:[%s3 + $0x110] sm:$0xff]
    %v140 = vld [vmem:[%s3 + $0x118] sm:$0xff]
    %v141 = vld [vmem:[%s3 + $0x120] sm:$0xff]
    %v142 = vld [vmem:[%s3 + $0x128] sm:$0xff]
    %v143 = vld [vmem:[%s3 + $0x130] sm:$0xff]
    %v144 = vld [vmem:[%s3 + $0x138] sm:$0xff]
    %v145 = vld [vmem:[%s3 + $0x140] sm:$0xff]
    %v146 = vld [vmem:[%s3 + $0x148] sm:$0xff]
    %v147 = vld [vmem:[%s3 + $0x150] sm:$0xff]
    %v148 = vld [vmem:[%s3 + $0x158] sm:$0xff]
    %v149 = vld [vmem:[%s3 + $0x160] sm:$0xff]
    %v150 = vld [vmem:[%s3 + $0x168] sm:$0xff]
    %v151 = vld [vmem:[%s3 + $0x170] sm:$0xff]
    %v152 = vld [vmem:[%s3 + $0x178] sm:$0xff]
    %v153 = vld [vmem:[%s3 + $0x180] sm:$0xff]
    %v154 = vld [vmem:[%s3 + $0x188] sm:$0xff]
    %v155 = vld [vmem:[%s3 + $0x190] sm:$0xff]
    %v156 = vld [vmem:[%s3 + $0x198] sm:$0xff]
    %v157 = vld [vmem:[%s3 + $0x1a0] sm:$0xff]
    %v158 = vld [vmem:[%s3 + $0x1a8] sm:$0xff]
    %v159 = vld [vmem:[%s3 + $0x1b0] sm:$0xff]
    %v160 = vld [vmem:[%s3 + $0x1b8] sm:$0xff]
    %v161 = vld [vmem:[%s3 + $0x1c0] sm:$0xff]
    %v162 = vld [vmem:[%s3 + $0x1c8] sm:$0xff]
    %v163 = vld [vmem:[%s3 + $0x1d0] sm:$0xff]
    %v164 = vld [vmem:[%s3 + $0x1d8] sm:$0xff]
    %v165 = vld [vmem:[%s3 + $0x1e0] sm:$0xff]
    %v166 = vld [vmem:[%s3 + $0x1e8] sm:$0xff]
    %v167 = vld [vmem:[%s3 + $0x1f0] sm:$0xff]
    %v168 = vld [vmem:[%s3 + $0x1f8] sm:$0xff]
    %v169 = vld [vmem:[#allocation8] sm:$0xff]
    %v170 = vld [vmem:[#allocation8 + $0x8] sm:$0xff]
    %v171 = vld [vmem:[#allocation8 + $0x10] sm:$0xff]
    %v172 = vld [vmem:[#allocation8 + $0x18] sm:$0xff]
    %v173 = vld [vmem:[#allocation8 + $0x20] sm:$0xff]
    %v174 = vld [vmem:[#allocation8 + $0x28] sm:$0xff]
    %v175 = vld [vmem:[#allocation8 + $0x30] sm:$0xff]
    %v176 = vld [vmem:[#allocation8 + $0x38] sm:$0xff]
    %vm177 = vcmask 261120
    %v179 = vsel %vm177, %v103, 0
    %181 = vmatprep.subr.mxu0 0.0
    %182 = vmatpush1.msra.mxu0 0.0
    %183 = vmatprep.subr.mxu0 0.0
    %184 = vmatpush1.msra.mxu0 0.0
    %185 = vmatprep.subr.mxu0 0.0
    %186 = vmatpush1.msra.mxu0 0.0
    %187 = vmatprep.subr.mxu0 0.0
    %188 = vmatpush1.msra.mxu0 0.0
    %189 = vmatprep.subr.mxu0 0.0
    %190 = vmatpush1.msra.mxu0 0.0
    %191 = vmatprep.subr.mxu0 0.0
    %192 = vmatpush1.msra.mxu0 0.0
    %193 = vmatprep.subr.mxu0 0.0
    %194 = vmatpush1.msra.mxu0 0.0
    %195 = vmatprep.subr.mxu0 0.0
    %196 = vmatpush1.msra.mxu0 0.0
    %197 = vmatprep.subr.mxu0 0.0
    %198 = vmatpush1.msra.mxu0 0.0
    %199 = vmatprep.subr.mxu0 0.0
    %200 = vmatpush1.msra.mxu0 0.0
    %201 = vmatprep.subr.mxu0 0.0
    %202 = vmatpush1.msra.mxu0 0.0
    %203 = vmatprep.subr.mxu0 0.0
    %204 = vmatpush1.msra.mxu0 0.0
    %205 = vmatprep.subr.mxu0 %v176
    %206 = vmatpush1.msra.mxu0 %v175
    %207 = vmatprep.subr.mxu0 %v174
    %208 = vmatpush1.msra.mxu0 %v173
    %209 = vmatprep.subr.mxu0 %v172
    %210 = vmatpush1.msra.mxu0 %v171
    %211 = vmatprep.subr.mxu0 %v170
    %212 = vmatpush1.msra.mxu0 %v169
    %213 = vmatprep.subr.mxu0 0.0
    %214 = vmatpush2.msra.mxu0 0.0
    %215 = vmatprep.subr.mxu0 0.0
    %216 = vmatpush2.msra.mxu0 0.0
    %217 = vmatprep.subr.mxu0 0.0
    %218 = vmatpush2.msra.mxu0 0.0
    %219 = vmatprep.subr.mxu0 0.0
    %220 = vmatpush2.msra.mxu0 0.0
    %221 = vmatprep.subr.mxu0 0.0
    %222 = vmatpush2.msra.mxu0 0.0
    %223 = vmatprep.subr.mxu0 0.0
    %224 = vmatpush2.msra.mxu0 0.0
    %225 = vmatprep.subr.mxu0 0.0
    %226 = vmatpush2.msra.mxu0 0.0
    %227 = vmatprep.subr.mxu0 0.0
    %228 = vmatpush2.msra.mxu0 0.0
    %229 = vmatprep.subr.mxu0 0.0
    %230 = vmatpush2.msra.mxu0 0.0
    %231 = vmatprep.subr.mxu0 0.0
    %232 = vmatpush2.msra.mxu0 0.0
    %233 = vmatprep.subr.mxu0 0.0
    %234 = vmatpush2.msra.mxu0 0.0
    %235 = vmatprep.subr.mxu0 0.0
    %236 = vmatpush2.msra.mxu0 0.0
    %237 = vmatprep.subr.mxu0 0.0
    %238 = vmatpush2.msra.mxu0 0.0
    %239 = vmatprep.subr.mxu0 0.0
    %240 = vmatpush2.msra.mxu0 0.0
    %241 = vmatprep.subr.mxu0 0.0
    %242 = vmatpush2.msra.mxu0 0.0
    %243 = vmatprep.subr.mxu0 0.0
    %244 = vmatpush2.msra.mxu0 0.0
    %245 = vmatprep.mubr.f32.mxu0 0.0
    %246 = vmatmul.mubr.f32.gmra.mxu0 %v179
    %v247 = vpop.f32.mrf.mxu0
    %v248 = vadd.f32 0.0, %v247
    %v249 = vpop.f32.mrf.mxu0
    %v250 = vadd.f32 0.0, %v249
    %251 = vdwg.mxu0
    %252 = vmatprep.subr.mxu0 %v136
    %253 = vmatpush1.msra.mxu0 %v135
    %254 = vmatprep.subr.mxu0 %v134
    %255 = vmatpush1.msra.mxu0 %v133
    %256 = vmatprep.subr.mxu0 %v132
    %257 = vmatpush1.msra.mxu0 %v131
    %258 = vmatprep.subr.mxu0 %v130
    %259 = vmatpush1.msra.mxu0 %v129
    %260 = vmatprep.subr.mxu0 %v128
    %261 = vmatpush1.msra.mxu0 %v127
    %262 = vmatprep.subr.mxu0 %v126
    %263 = vmatpush1.msra.mxu0 %v125
    %264 = vmatprep.subr.mxu0 %v124
    %265 = vmatpush1.msra.mxu0 %v123
    %266 = vmatprep.subr.mxu0 %v122
    %267 = vmatpush1.msra.mxu0 %v121
    %268 = vmatprep.subr.mxu0 %v120
    %269 = vmatpush1.msra.mxu0 %v119
    %270 = vmatprep.subr.mxu0 %v118
    %271 = vmatpush1.msra.mxu0 %v117
    %272 = vmatprep.subr.mxu0 %v116
    %273 = vmatpush1.msra.mxu0 %v115
    %274 = vmatprep.subr.mxu0 %v114
    %275 = vmatpush1.msra.mxu0 %v113
    %276 = vmatprep.subr.mxu0 %v112
    %277 = vmatpush1.msra.mxu0 %v111
    %278 = vmatprep.subr.mxu0 %v110
    %279 = vmatpush1.msra.mxu0 %v109
    %280 = vmatprep.subr.mxu0 %v108
    %281 = vmatpush1.msra.mxu0 %v107
    %282 = vmatprep.subr.mxu0 %v106
    %283 = vmatpush1.msra.mxu0 %v105
    %284 = vmatprep.subr.mxu0 %v168
    %285 = vmatpush2.msra.mxu0 %v167
    %286 = vmatprep.subr.mxu0 %v166
    %287 = vmatpush2.msra.mxu0 %v165
    %288 = vmatprep.subr.mxu0 %v164
    %289 = vmatpush2.msra.mxu0 %v163
    %290 = vmatprep.subr.mxu0 %v162
    %291 = vmatpush2.msra.mxu0 %v161
    %292 = vmatprep.subr.mxu0 %v160
    %293 = vmatpush2.msra.mxu0 %v159
    %294 = vmatprep.subr.mxu0 %v158
    %295 = vmatpush2.msra.mxu0 %v157
    %296 = vmatprep.subr.mxu0 %v156
    %297 = vmatpush2.msra.mxu0 %v155
    %298 = vmatprep.subr.mxu0 %v154
    %299 = vmatpush2.msra.mxu0 %v153
    %300 = vmatprep.subr.mxu0 %v152
    %301 = vmatpush2.msra.mxu0 %v151
    %302 = vmatprep.subr.mxu0 %v150
    %303 = vmatpush2.msra.mxu0 %v149
    %304 = vmatprep.subr.mxu0 %v148
    %305 = vmatpush2.msra.mxu0 %v147
    %306 = vmatprep.subr.mxu0 %v146
    %307 = vmatpush2.msra.mxu0 %v145
    %308 = vmatprep.subr.mxu0 %v144
    %309 = vmatpush2.msra.mxu0 %v143
    %310 = vmatprep.subr.mxu0 %v142
    %311 = vmatpush2.msra.mxu0 %v141
    %312 = vmatprep.subr.mxu0 %v140
    %313 = vmatpush2.msra.mxu0 %v139
    %314 = vmatprep.subr.mxu0 %v138
    %315 = vmatpush2.msra.mxu0 %v137
    %316 = vmatprep.mubr.f32.mxu0 %v102
    %317 = vmatmul.mubr.f32.gmra.mxu0 %v101
    %v318 = vpop.f32.mrf.mxu0
    %v319 = vadd.f32 %v248, %v318
    %v320 = vpop.f32.mrf.mxu0
    %v321 = vadd.f32 %v250, %v320
    %322 = vdwg.mxu0
    %v323 = vld [vmem:[%s5] sm:$0x3]
    %v325 = vlaneseq
    %v326 = vshrl.u32 %v325, 7
    %v327 = vsub.s32 0, %v326
    %v328 = vrot.slane %v323, %v327
    %v329 = vlaneseq
    %v330 = vshrl.u32 %v329, 7
    %v331 = vsub.s32 1, %v330
    %v332 = vrot.slane %v323, %v331
    %v335 = vadd.f32 %v319, %v328
    %v336 = vadd.f32 %v321, %v332
    %v337 = vmax.f32 %v335, 0.0
    %v338 = vmax.f32 %v336, 0.0
    %v339 = vld [vmem:[#allocation7] sm:$0xff]
    %v340 = vld [vmem:[#allocation7 + $0x8] sm:$0xff]
    %v341 = vld [vmem:[#allocation7 + $0x10] sm:$0xff]
    %v342 = vld [vmem:[#allocation7 + $0x18] sm:$0xff]
    %v343 = vld [vmem:[#allocation7 + $0x20] sm:$0xff]
    %v344 = vld [vmem:[#allocation7 + $0x28] sm:$0xff]
    %v345 = vld [vmem:[#allocation7 + $0x30] sm:$0xff]
    %v346 = vld [vmem:[#allocation7 + $0x38] sm:$0xff]
    %v347 = vld [vmem:[#allocation7 + $0x40] sm:$0xff]
    %v348 = vld [vmem:[#allocation7 + $0x48] sm:$0xff]
    %v349 = vld [vmem:[#allocation7 + $0x50] sm:$0xff]
    %v350 = vld [vmem:[#allocation7 + $0x58] sm:$0xff]
    %v351 = vld [vmem:[#allocation7 + $0x60] sm:$0xff]
    %v352 = vld [vmem:[#allocation7 + $0x68] sm:$0xff]
    %v353 = vld [vmem:[#allocation7 + $0x70] sm:$0xff]
    %v354 = vld [vmem:[#allocation7 + $0x78] sm:$0xff]
    %v355 = vld [vmem:[#allocation7 + $0x80] sm:$0xff]
    %v356 = vld [vmem:[#allocation7 + $0x88] sm:$0xff]
    %v357 = vld [vmem:[#allocation7 + $0x90] sm:$0xff]
    %v358 = vld [vmem:[#allocation7 + $0x98] sm:$0xff]
    %v359 = vld [vmem:[#allocation7 + $0xa0] sm:$0xff]
    %v360 = vld [vmem:[#allocation7 + $0xa8] sm:$0xff]
    %v361 = vld [vmem:[#allocation7 + $0xb0] sm:$0xff]
    %v362 = vld [vmem:[#allocation7 + $0xb8] sm:$0xff]
    %v363 = vld [vmem:[#allocation7 + $0xc0] sm:$0xff]
    %v364 = vld [vmem:[#allocation7 + $0xc8] sm:$0xff]
    %v365 = vld [vmem:[#allocation7 + $0xd0] sm:$0xff]
    %v366 = vld [vmem:[#allocation7 + $0xd8] sm:$0xff]
    %v367 = vld [vmem:[#allocation7 + $0xe0] sm:$0xff]
    %v368 = vld [vmem:[#allocation7 + $0xe8] sm:$0xff]
    %v369 = vld [vmem:[#allocation7 + $0xf0] sm:$0xff]
    %v370 = vld [vmem:[#allocation7 + $0xf8] sm:$0xff]
    %v371 = vld [vmem:[#allocation7 + $0x100] sm:$0xff]
    %v372 = vld [vmem:[#allocation7 + $0x108] sm:$0xff]
    %v373 = vld [vmem:[#allocation7 + $0x110] sm:$0xff]
    %v374 = vld [vmem:[#allocation7 + $0x118] sm:$0xff]
    %v375 = vld [vmem:[#allocation7 + $0x120] sm:$0xff]
    %v376 = vld [vmem:[#allocation7 + $0x128] sm:$0xff]
    %v377 = vld [vmem:[#allocation7 + $0x130] sm:$0xff]
    %v378 = vld [vmem:[#allocation7 + $0x138] sm:$0xff]
    %v379 = vld [vmem:[#allocation7 + $0x140] sm:$0xff]
    %v380 = vld [vmem:[#allocation7 + $0x148] sm:$0xff]
    %v381 = vld [vmem:[#allocation7 + $0x150] sm:$0xff]
    %v382 = vld [vmem:[#allocation7 + $0x158] sm:$0xff]
    %v383 = vld [vmem:[#allocation7 + $0x160] sm:$0xff]
    %v384 = vld [vmem:[#allocation7 + $0x168] sm:$0xff]
    %v385 = vld [vmem:[#allocation7 + $0x170] sm:$0xff]
    %v386 = vld [vmem:[#allocation7 + $0x178] sm:$0xff]
    %v387 = vld [vmem:[#allocation7 + $0x180] sm:$0xff]
    %v388 = vld [vmem:[#allocation7 + $0x188] sm:$0xff]
    %v389 = vld [vmem:[#allocation7 + $0x190] sm:$0xff]
    %v390 = vld [vmem:[#allocation7 + $0x198] sm:$0xff]
    %v391 = vld [vmem:[#allocation7 + $0x1a0] sm:$0xff]
    %v392 = vld [vmem:[#allocation7 + $0x1a8] sm:$0xff]
    %v393 = vld [vmem:[#allocation7 + $0x1b0] sm:$0xff]
    %v394 = vld [vmem:[#allocation7 + $0x1b8] sm:$0xff]
    %v395 = vld [vmem:[#allocation7 + $0x1c0] sm:$0xff]
    %v396 = vld [vmem:[#allocation7 + $0x1c8] sm:$0xff]
    %v397 = vld [vmem:[#allocation7 + $0x1d0] sm:$0xff]
    %v398 = vld [vmem:[#allocation7 + $0x1d8] sm:$0xff]
    %v399 = vld [vmem:[#allocation7 + $0x1e0] sm:$0xff]
    %v400 = vld [vmem:[#allocation7 + $0x1e8] sm:$0xff]
    %v401 = vld [vmem:[#allocation7 + $0x1f0] sm:$0xff]
    %v402 = vld [vmem:[#allocation7 + $0x1f8] sm:$0xff]
    %v403 = vld [vmem:[%s6] sm:$0x3]
    %v405 = vlaneseq
    %v406 = vshrl.u32 %v405, 7
    %v407 = vsub.s32 0, %v406
    %v408 = vrot.slane %v403, %v407
    %v409 = vlaneseq
    %v410 = vshrl.u32 %v409, 7
    %v411 = vsub.s32 1, %v410
    %v412 = vrot.slane %v403, %v411
    %415 = vmatprep.subr.mxu0 %v370
    %416 = vmatpush1.msra.mxu0 %v369
    %417 = vmatprep.subr.mxu0 %v368
    %418 = vmatpush1.msra.mxu0 %v367
    %419 = vmatprep.subr.mxu0 %v366
    %420 = vmatpush1.msra.mxu0 %v365
    %421 = vmatprep.subr.mxu0 %v364
    %422 = vmatpush1.msra.mxu0 %v363
    %423 = vmatprep.subr.mxu0 %v362
    %424 = vmatpush1.msra.mxu0 %v361
    %425 = vmatprep.subr.mxu0 %v360
    %426 = vmatpush1.msra.mxu0 %v359
    %427 = vmatprep.subr.mxu0 %v358
    %428 = vmatpush1.msra.mxu0 %v357
    %429 = vmatprep.subr.mxu0 %v356
    %430 = vmatpush1.msra.mxu0 %v355
    %431 = vmatprep.subr.mxu0 %v354
    %432 = vmatpush1.msra.mxu0 %v353
    %433 = vmatprep.subr.mxu0 %v352
    %434 = vmatpush1.msra.mxu0 %v351
    %435 = vmatprep.subr.mxu0 %v350
    %436 = vmatpush1.msra.mxu0 %v349
    %437 = vmatprep.subr.mxu0 %v348
    %438 = vmatpush1.msra.mxu0 %v347
    %439 = vmatprep.subr.mxu0 %v346
    %440 = vmatpush1.msra.mxu0 %v345
    %441 = vmatprep.subr.mxu0 %v344
    %442 = vmatpush1.msra.mxu0 %v343
    %443 = vmatprep.subr.mxu0 %v342
    %444 = vmatpush1.msra.mxu0 %v341
    %445 = vmatprep.subr.mxu0 %v340
    %446 = vmatpush1.msra.mxu0 %v339
    %447 = vmatprep.subr.mxu0 %v402
    %448 = vmatpush2.msra.mxu0 %v401
    %449 = vmatprep.subr.mxu0 %v400
    %450 = vmatpush2.msra.mxu0 %v399
    %451 = vmatprep.subr.mxu0 %v398
    %452 = vmatpush2.msra.mxu0 %v397
    %453 = vmatprep.subr.mxu0 %v396
    %454 = vmatpush2.msra.mxu0 %v395
    %455 = vmatprep.subr.mxu0 %v394
    %456 = vmatpush2.msra.mxu0 %v393
    %457 = vmatprep.subr.mxu0 %v392
    %458 = vmatpush2.msra.mxu0 %v391
    %459 = vmatprep.subr.mxu0 %v390
    %460 = vmatpush2.msra.mxu0 %v389
    %461 = vmatprep.subr.mxu0 %v388
    %462 = vmatpush2.msra.mxu0 %v387
    %463 = vmatprep.subr.mxu0 %v386
    %464 = vmatpush2.msra.mxu0 %v385
    %465 = vmatprep.subr.mxu0 %v384
    %466 = vmatpush2.msra.mxu0 %v383
    %467 = vmatprep.subr.mxu0 %v382
    %468 = vmatpush2.msra.mxu0 %v381
    %469 = vmatprep.subr.mxu0 %v380
    %470 = vmatpush2.msra.mxu0 %v379
    %471 = vmatprep.subr.mxu0 %v378
    %472 = vmatpush2.msra.mxu0 %v377
    %473 = vmatprep.subr.mxu0 %v376
    %474 = vmatpush2.msra.mxu0 %v375
    %475 = vmatprep.subr.mxu0 %v374
    %476 = vmatpush2.msra.mxu0 %v373
    %477 = vmatprep.subr.mxu0 %v372
    %478 = vmatpush2.msra.mxu0 %v371
    %479 = vmatprep.mubr.f32.mxu0 %v338
    %480 = vmatmul.mubr.f32.gmra.mxu0 %v337
    %v481 = vpop.f32.mrf.mxu0
    %v482 = vadd.f32 %v408, %v481
    %v483 = vpop.f32.mrf.mxu0
    %v484 = vadd.f32 %v412, %v483
    %485 = vdwg.mxu0
    %v486 = vmax.f32 %v482, 0.0
    %v487 = vmax.f32 %v484, 0.0
    %v488 = vld [vmem:[%s8] sm:$0xff]
    %v489 = vld [vmem:[%s8 + $0x8] sm:$0xff]
    %v490 = vld [vmem:[%s8 + $0x10] sm:$0xff]
    %v491 = vld [vmem:[%s8 + $0x18] sm:$0xff]
    %v492 = vld [vmem:[%s8 + $0x20] sm:$0xff]
    %v493 = vld [vmem:[%s8 + $0x28] sm:$0xff]
    %v494 = vld [vmem:[%s8 + $0x30] sm:$0xff]
    %v495 = vld [vmem:[%s8 + $0x38] sm:$0xff]
    %v496 = vld [vmem:[%s8 + $0x40] sm:$0xff]
    %v497 = vld [vmem:[%s8 + $0x48] sm:$0xff]
    %v498 = vld [vmem:[%s8 + $0x50] sm:$0xff]
    %v499 = vld [vmem:[%s8 + $0x58] sm:$0xff]
    %v500 = vld [vmem:[%s8 + $0x60] sm:$0xff]
    %v501 = vld [vmem:[%s8 + $0x68] sm:$0xff]
    %v502 = vld [vmem:[%s8 + $0x70] sm:$0xff]
    %v503 = vld [vmem:[%s8 + $0x78] sm:$0xff]
    %v504 = vld [vmem:[%s8 + $0x80] sm:$0xff]
    %v505 = vld [vmem:[%s8 + $0x88] sm:$0xff]
    %v506 = vld [vmem:[%s8 + $0x90] sm:$0xff]
    %v507 = vld [vmem:[%s8 + $0x98] sm:$0xff]
    %v508 = vld [vmem:[%s8 + $0xa0] sm:$0xff]
    %v509 = vld [vmem:[%s8 + $0xa8] sm:$0xff]
    %v510 = vld [vmem:[%s8 + $0xb0] sm:$0xff]
    %v511 = vld [vmem:[%s8 + $0xb8] sm:$0xff]
    %v512 = vld [vmem:[%s8 + $0xc0] sm:$0xff]
    %v513 = vld [vmem:[%s8 + $0xc8] sm:$0xff]
    %v514 = vld [vmem:[%s8 + $0xd0] sm:$0xff]
    %v515 = vld [vmem:[%s8 + $0xd8] sm:$0xff]
    %v516 = vld [vmem:[%s8 + $0xe0] sm:$0xff]
    %v517 = vld [vmem:[%s8 + $0xe8] sm:$0xff]
    %v518 = vld [vmem:[%s8 + $0xf0] sm:$0xff]
    %v519 = vld [vmem:[%s8 + $0xf8] sm:$0xff]
    %520 = vmatprep.subr.mxu0 0.0
    %521 = vmatpush1.msra.mxu0 %v503
    %522 = vmatprep.subr.mxu0 0.0
    %523 = vmatpush1.msra.mxu0 %v502
    %524 = vmatprep.subr.mxu0 0.0
    %525 = vmatpush1.msra.mxu0 %v501
    %526 = vmatprep.subr.mxu0 0.0
    %527 = vmatpush1.msra.mxu0 %v500
    %528 = vmatprep.subr.mxu0 0.0
    %529 = vmatpush1.msra.mxu0 %v499
    %530 = vmatprep.subr.mxu0 0.0
    %531 = vmatpush1.msra.mxu0 %v498
    %532 = vmatprep.subr.mxu0 0.0
    %533 = vmatpush1.msra.mxu0 %v497
    %534 = vmatprep.subr.mxu0 0.0
    %535 = vmatpush1.msra.mxu0 %v496
    %536 = vmatprep.subr.mxu0 0.0
    %537 = vmatpush1.msra.mxu0 %v495
    %538 = vmatprep.subr.mxu0 0.0
    %539 = vmatpush1.msra.mxu0 %v494
    %540 = vmatprep.subr.mxu0 0.0
    %541 = vmatpush1.msra.mxu0 %v493
    %542 = vmatprep.subr.mxu0 0.0
    %543 = vmatpush1.msra.mxu0 %v492
    %544 = vmatprep.subr.mxu0 0.0
    %545 = vmatpush1.msra.mxu0 %v491
    %546 = vmatprep.subr.mxu0 0.0
    %547 = vmatpush1.msra.mxu0 %v490
    %548 = vmatprep.subr.mxu0 0.0
    %549 = vmatpush1.msra.mxu0 %v489
    %550 = vmatprep.subr.mxu0 0.0
    %551 = vmatpush1.msra.mxu0 %v488
    %552 = vmatprep.subr.mxu0 0.0
    %553 = vmatpush2.msra.mxu0 %v519
    %554 = vmatprep.subr.mxu0 0.0
    %555 = vmatpush2.msra.mxu0 %v518
    %556 = vmatprep.subr.mxu0 0.0
    %557 = vmatpush2.msra.mxu0 %v517
    %558 = vmatprep.subr.mxu0 0.0
    %559 = vmatpush2.msra.mxu0 %v516
    %560 = vmatprep.subr.mxu0 0.0
    %561 = vmatpush2.msra.mxu0 %v515
    %562 = vmatprep.subr.mxu0 0.0
    %563 = vmatpush2.msra.mxu0 %v514
    %564 = vmatprep.subr.mxu0 0.0
    %565 = vmatpush2.msra.mxu0 %v513
    %566 = vmatprep.subr.mxu0 0.0
    %567 = vmatpush2.msra.mxu0 %v512
    %568 = vmatprep.subr.mxu0 0.0
    %569 = vmatpush2.msra.mxu0 %v511
    %570 = vmatprep.subr.mxu0 0.0
    %571 = vmatpush2.msra.mxu0 %v510
    %572 = vmatprep.subr.mxu0 0.0
    %573 = vmatpush2.msra.mxu0 %v509
    %574 = vmatprep.subr.mxu0 0.0
    %575 = vmatpush2.msra.mxu0 %v508
    %576 = vmatprep.subr.mxu0 0.0
    %577 = vmatpush2.msra.mxu0 %v507
    %578 = vmatprep.subr.mxu0 0.0
    %579 = vmatpush2.msra.mxu0 %v506
    %580 = vmatprep.subr.mxu0 0.0
    %581 = vmatpush2.msra.mxu0 %v505
    %582 = vmatprep.subr.mxu0 0.0
    %583 = vmatpush2.msra.mxu0 %v504
    %584 = vmatprep.mubr.f32.mxu0 %v487
    %585 = vmatmul.mubr.f32.gmra.mxu0 %v486
    %v586 = vpop.f32.mrf.mxu0
    %v587 = vadd.f32 0.0, %v586
    %v588 = vpop.f32.mrf.mxu0
    %589 = vdwg.mxu0
    %vm590 = vcmp.gt.f32.partialorder %v104, 0.0
    %v591 = vsel %vm590, %v587, -1e+30
    %vm592 = vcmask 64512
    %v593 = vsel %vm592, %v591, -inf
    %594 = vmax.xlane.f32.xlu0 %v593
    %v595 = vpop.xlane.xlu0 %594
    %v596 = vsub.f32 %v591, %v595
    %v597 = vmul.f32 %v596, 1.442695
    %v598 = vpow.pop %v597
    %v599 = vmul.f32 %v598, %v104
    %v600 = vsel %vm592, %v599, 0.0
    %601 = vadd.xlane.f32.xlu0 %v600
    %v602 = vpop.xlane.xlu0 %601
    %v603 = vmax.f32 %v602, 1e-30
    %v604 = vrcp.pop %v603
    %v605 = vmul.f32 %v603, %v604
    %v606 = vsub.f32 2.0, %v605
    %v607 = vmul.f32 %v604, %v606
    %v608 = vmul.f32 %v599, %v607
    %v609 = vld [vmem:[#allocation10] sm:$0xff]
    %v610 = vld [vmem:[#allocation10 + $0x8] sm:$0xff]
    %v612 = vsel %vm592, %v608, 0
    %614 = vmatprep.subr.mxu0 0.0
    %615 = vmatpush1.msra.mxu0 0.0
    %616 = vmatprep.subr.mxu0 0.0
    %617 = vmatpush1.msra.mxu0 0.0
    %618 = vmatprep.subr.mxu0 0.0
    %619 = vmatpush1.msra.mxu0 0.0
    %620 = vmatprep.subr.mxu0 0.0
    %621 = vmatpush1.msra.mxu0 0.0
    %622 = vmatprep.subr.mxu0 0.0
    %623 = vmatpush1.msra.mxu0 0.0
    %624 = vmatprep.subr.mxu0 0.0
    %625 = vmatpush1.msra.mxu0 0.0
    %626 = vmatprep.subr.mxu0 0.0
    %627 = vmatpush1.msra.mxu0 0.0
    %628 = vmatprep.subr.mxu0 0.0
    %629 = vmatpush1.msra.mxu0 0.0
    %630 = vmatprep.subr.mxu0 0.0
    %631 = vmatpush1.msra.mxu0 0.0
    %632 = vmatprep.subr.mxu0 0.0
    %633 = vmatpush1.msra.mxu0 0.0
    %634 = vmatprep.subr.mxu0 0.0
    %635 = vmatpush1.msra.mxu0 0.0
    %636 = vmatprep.subr.mxu0 0.0
    %637 = vmatpush1.msra.mxu0 0.0
    %638 = vmatprep.subr.mxu0 0.0
    %639 = vmatpush1.msra.mxu0 0.0
    %640 = vmatprep.subr.mxu0 0.0
    %641 = vmatpush1.msra.mxu0 0.0
    %642 = vmatprep.subr.mxu0 0.0
    %643 = vmatpush1.msra.mxu0 0.0
    %644 = vmatprep.subr.mxu0 %v610
    %645 = vmatpush1.msra.mxu0 %v609
    %646 = vmatprep.subr.mxu0 0.0
    %647 = vmatpush2.msra.mxu0 0.0
    %648 = vmatprep.subr.mxu0 0.0
    %649 = vmatpush2.msra.mxu0 0.0
    %650 = vmatprep.subr.mxu0 0.0
    %651 = vmatpush2.msra.mxu0 0.0
    %652 = vmatprep.subr.mxu0 0.0
    %653 = vmatpush2.msra.mxu0 0.0
    %654 = vmatprep.subr.mxu0 0.0
    %655 = vmatpush2.msra.mxu0 0.0
    %656 = vmatprep.subr.mxu0 0.0
    %657 = vmatpush2.msra.mxu0 0.0
    %658 = vmatprep.subr.mxu0 0.0
    %659 = vmatpush2.msra.mxu0 0.0
    %660 = vmatprep.subr.mxu0 0.0
    %661 = vmatpush2.msra.mxu0 0.0
    %662 = vmatprep.subr.mxu0 0.0
    %663 = vmatpush2.msra.mxu0 0.0
    %664 = vmatprep.subr.mxu0 0.0
    %665 = vmatpush2.msra.mxu0 0.0
    %666 = vmatprep.subr.mxu0 0.0
    %667 = vmatpush2.msra.mxu0 0.0
    %668 = vmatprep.subr.mxu0 0.0
    %669 = vmatpush2.msra.mxu0 0.0
    %670 = vmatprep.subr.mxu0 0.0
    %671 = vmatpush2.msra.mxu0 0.0
    %672 = vmatprep.subr.mxu0 0.0
    %673 = vmatpush2.msra.mxu0 0.0
    %674 = vmatprep.subr.mxu0 0.0
    %675 = vmatpush2.msra.mxu0 0.0
    %676 = vmatprep.subr.mxu0 0.0
    %677 = vmatpush2.msra.mxu0 0.0
    %678 = vmatprep.mubr.f32.mxu0 0.0
    %679 = vmatmul.mubr.f32.gmra.mxu0 %v612
    %v680 = vpop.f32.mrf.mxu0
    %v681 = vadd.f32 0.0, %v680
    %v682 = vpop.f32.mrf.mxu0
    %v683 = vadd.f32 0.0, %v682
    %684 = vdwg.mxu0
    %v685 = vmul.f32 %v681, %v101
    %v686 = vmul.f32 %v683, %v102
    %v687 = vld [vmem:[%s10] sm:$0xff]
    %v688 = vld [vmem:[%s10 + $0x8] sm:$0xff]
    %v689 = vld [vmem:[%s10 + $0x10] sm:$0xff]
    %v690 = vld [vmem:[%s10 + $0x18] sm:$0xff]
    %v691 = vld [vmem:[%s10 + $0x20] sm:$0xff]
    %v692 = vld [vmem:[%s10 + $0x28] sm:$0xff]
    %v693 = vld [vmem:[%s10 + $0x30] sm:$0xff]
    %v694 = vld [vmem:[%s10 + $0x38] sm:$0xff]
    %v695 = vld [vmem:[%s10 + $0x40] sm:$0xff]
    %v696 = vld [vmem:[%s10 + $0x48] sm:$0xff]
    %v697 = vld [vmem:[%s10 + $0x50] sm:$0xff]
    %v698 = vld [vmem:[%s10 + $0x58] sm:$0xff]
    %v699 = vld [vmem:[%s10 + $0x60] sm:$0xff]
    %v700 = vld [vmem:[%s10 + $0x68] sm:$0xff]
    %v701 = vld [vmem:[%s10 + $0x70] sm:$0xff]
    %v702 = vld [vmem:[%s10 + $0x78] sm:$0xff]
    %v703 = vld [vmem:[%s10 + $0x80] sm:$0xff]
    %v704 = vld [vmem:[%s10 + $0x88] sm:$0xff]
    %v705 = vld [vmem:[%s10 + $0x90] sm:$0xff]
    %v706 = vld [vmem:[%s10 + $0x98] sm:$0xff]
    %v707 = vld [vmem:[%s10 + $0xa0] sm:$0xff]
    %v708 = vld [vmem:[%s10 + $0xa8] sm:$0xff]
    %v709 = vld [vmem:[%s10 + $0xb0] sm:$0xff]
    %v710 = vld [vmem:[%s10 + $0xb8] sm:$0xff]
    %v711 = vld [vmem:[%s10 + $0xc0] sm:$0xff]
    %v712 = vld [vmem:[%s10 + $0xc8] sm:$0xff]
    %v713 = vld [vmem:[%s10 + $0xd0] sm:$0xff]
    %v714 = vld [vmem:[%s10 + $0xd8] sm:$0xff]
    %v715 = vld [vmem:[%s10 + $0xe0] sm:$0xff]
    %v716 = vld [vmem:[%s10 + $0xe8] sm:$0xff]
    %v717 = vld [vmem:[%s10 + $0xf0] sm:$0xff]
    %v718 = vld [vmem:[%s10 + $0xf8] sm:$0xff]
    %v719 = vsel %vm592, %v104, 0.0
    %720 = vadd.xlane.f32.xlu0 %v719
    %v721 = vpop.xlane.xlu0 %720
    %vm722 = vcmp.gt.f32.partialorder %v721, 0.0
    %723 = vmatprep.subr.mxu0 0.0
    %724 = vmatpush1.msra.mxu0 %v702
    %725 = vmatprep.subr.mxu0 0.0
    %726 = vmatpush1.msra.mxu0 %v701
    %727 = vmatprep.subr.mxu0 0.0
    %728 = vmatpush1.msra.mxu0 %v700
    %729 = vmatprep.subr.mxu0 0.0
    %730 = vmatpush1.msra.mxu0 %v699
    %731 = vmatprep.subr.mxu0 0.0
    %732 = vmatpush1.msra.mxu0 %v698
    %733 = vmatprep.subr.mxu0 0.0
    %734 = vmatpush1.msra.mxu0 %v697
    %735 = vmatprep.subr.mxu0 0.0
    %736 = vmatpush1.msra.mxu0 %v696
    %737 = vmatprep.subr.mxu0 0.0
    %738 = vmatpush1.msra.mxu0 %v695
    %739 = vmatprep.subr.mxu0 0.0
    %740 = vmatpush1.msra.mxu0 %v694
    %741 = vmatprep.subr.mxu0 0.0
    %742 = vmatpush1.msra.mxu0 %v693
    %743 = vmatprep.subr.mxu0 0.0
    %744 = vmatpush1.msra.mxu0 %v692
    %745 = vmatprep.subr.mxu0 0.0
    %746 = vmatpush1.msra.mxu0 %v691
    %747 = vmatprep.subr.mxu0 0.0
    %748 = vmatpush1.msra.mxu0 %v690
    %749 = vmatprep.subr.mxu0 0.0
    %750 = vmatpush1.msra.mxu0 %v689
    %751 = vmatprep.subr.mxu0 0.0
    %752 = vmatpush1.msra.mxu0 %v688
    %753 = vmatprep.subr.mxu0 0.0
    %754 = vmatpush1.msra.mxu0 %v687
    %755 = vmatprep.subr.mxu0 0.0
    %756 = vmatpush2.msra.mxu0 %v718
    %757 = vmatprep.subr.mxu0 0.0
    %758 = vmatpush2.msra.mxu0 %v717
    %759 = vmatprep.subr.mxu0 0.0
    %760 = vmatpush2.msra.mxu0 %v716
    %761 = vmatprep.subr.mxu0 0.0
    %762 = vmatpush2.msra.mxu0 %v715
    %763 = vmatprep.subr.mxu0 0.0
    %764 = vmatpush2.msra.mxu0 %v714
    %765 = vmatprep.subr.mxu0 0.0
    %766 = vmatpush2.msra.mxu0 %v713
    %767 = vmatprep.subr.mxu0 0.0
    %768 = vmatpush2.msra.mxu0 %v712
    %769 = vmatprep.subr.mxu0 0.0
    %770 = vmatpush2.msra.mxu0 %v711
    %771 = vmatprep.subr.mxu0 0.0
    %772 = vmatpush2.msra.mxu0 %v710
    %773 = vmatprep.subr.mxu0 0.0
    %774 = vmatpush2.msra.mxu0 %v709
    %775 = vmatprep.subr.mxu0 0.0
    %776 = vmatpush2.msra.mxu0 %v708
    %777 = vmatprep.subr.mxu0 0.0
    %778 = vmatpush2.msra.mxu0 %v707
    %779 = vmatprep.subr.mxu0 0.0
    %780 = vmatpush2.msra.mxu0 %v706
    %781 = vmatprep.subr.mxu0 0.0
    %782 = vmatpush2.msra.mxu0 %v705
    %783 = vmatprep.subr.mxu0 0.0
    %784 = vmatpush2.msra.mxu0 %v704
    %785 = vmatprep.subr.mxu0 0.0
    %786 = vmatpush2.msra.mxu0 %v703
    %787 = vmatprep.mubr.f32.mxu0 %v686
    %788 = vmatmul.mubr.f32.gmra.mxu0 %v685
    %v789 = vpop.f32.mrf.mxu0
    %v790 = vadd.f32 %v103, %v789
    %v791 = vpop.f32.mrf.mxu0
    %792 = vdwg.mxu0
    %v793 = vmul.f32 %v790, 0.5
    %v794 = vsel %vm722, 1, 0
    %vm795 = vcmp.eq.s32.totalorder %v794, 1
    %v796 = vsel %vm795, %v793, %v103
    %797 = vst.msk [vmem:[#allocation11] sm:$0xff] %vm177, %v796
    // Predicated region
    $region66: #{tpu_custom_call.1} parent=1 // pred_check
      _
    $region67: #{tpu_custom_call.1} parent=1 // pred_check_branch
      %799 = sbr.rel (0) target = $region69
    $region68: #{tpu_custom_call.1} parent=1 // pred_region
      %s801 = ssub.s32 128, 128
      %802 = vsyncadd [#allocation4], %s801
      %s804 = sshll.u32 [#allocation11], 4
      %s805 = int_to_ptr.vmem [resolvable:$true] %s804
      %807 = dma.vmem_to_hbm [thread:$0]  %s805, 128, %s11, [#allocation4]
    $region69: #{tpu_custom_call.1} parent=1 // pred_fallthru
      _
    // Predicated region
    $region70: #{tpu_custom_call.1} parent=1 // pred_check
      _
    $region71: #{tpu_custom_call.1} parent=1 // pred_check_branch
      %809 = sbr.rel (0) target = $region73
    $region72: #{tpu_custom_call.1} parent=1 // pred_region
      %810 = dma.done [#allocation4], 128
    $region73: #{tpu_custom_call.1} parent=1 // pred_fallthru
      _
    %811 = vsyncpa [#allocation3], 1
    %812 = vsyncpa [#allocation6], 1
    %813 = vsyncpa [#allocation9], 1
    %814 = vsyncpa [#allocation4], 1

</llo_original>
